<compile_context>
chip_gen: v7x
topology: tpu7x:2x2x1
jax: 0.10.0
libtpu: 0.0.40
codegen_flags: <defaults>
</compile_context>

<pallas_src>
import functools

import jax
import jax.numpy as jnp
from jax.experimental import pallas as pl
from jax.experimental.pallas import tpu as pltpu


def _round_up(x, m):
    return ((x + m - 1) // m) * m


def _vmem_limit_bytes():
    # Generation-aware scoped-VMEM budget (v5e/v6e: 128 MiB phys, v7x: 64 MiB/TC).
    try:
        info = pltpu.get_tpu_info()
        cap = getattr(info, "vmem_capacity_bytes", 0)
        if cap:
            return min(int(cap * 0.7), 100 * 1024 * 1024)
    except Exception:
        pass
    return 48 * 1024 * 1024


# ---------------------------------------------------------------------------
# Kernel 1: row-wise RMSNorm * scale for the embedding rows.
#   f32 math, bf16 output (MXU operand prep). The model's column block is
#   selected by the index_map — no XLA strided-slice copy of the embedding.
# ---------------------------------------------------------------------------
def _rmsnorm_scale_kernel(x_ref, s_ref, o_ref, *, eps):
    x = x_ref[...].astype(jnp.float32)
    ms = jnp.mean(x * x, axis=-1, keepdims=True)
    o_ref[...] = (x * jax.lax.rsqrt(ms + eps) * s_ref[...]).astype(o_ref.dtype)


def _embed_rmsnorm(embedding, scale, *, d, col_block, eps, tile):
    V = embedding.shape[0]
    return pl.pallas_call(
        functools.partial(_rmsnorm_scale_kernel, eps=eps),
        out_shape=jax.ShapeDtypeStruct((V, d), jnp.bfloat16),
        grid_spec=pltpu.PrefetchScalarGridSpec(
            num_scalar_prefetch=0,
            grid=(pl.cdiv(V, tile),),
            in_specs=[
                pl.BlockSpec((tile, d), lambda i: (i, col_block)),
                pl.BlockSpec((1, d), lambda i: (0, 0)),
            ],
            out_specs=pl.BlockSpec((tile, d), lambda i: (i, 0)),
        ),
        compiler_params=pltpu.CompilerParams(
            dimension_semantics=("parallel",),
            vmem_limit_bytes=_vmem_limit_bytes()),
    )(embedding, scale)


# ---------------------------------------------------------------------------
# Kernel 2: fused x-RMSNorm + logits.
#   Under pl.when(j == 0) the (tm, d) row block of x is normalized (f32 math)
#   into a bf16 VMEM scratch that persists across the j sweep; each step then
#   does logits_tile = xn @ en^T (contract last dims, f32 MXU accumulation).
# ---------------------------------------------------------------------------
def _logits_kernel(x_ref, fs_ref, en_ref, o_ref, xn_ref, *, eps):
    @pl.when(pl.program_id(1) == 0)
    def _():
        x = x_ref[...].astype(jnp.float32)
        ms = jnp.mean(x * x, axis=-1, keepdims=True)
        xn_ref[...] = (x * jax.lax.rsqrt(ms + eps) * fs_ref[...]).astype(xn_ref.dtype)

    o_ref[...] = jax.lax.dot_general(
        xn_ref[...], en_ref[...],
        dimension_numbers=(((1,), (1,)), ((), ())),
        preferred_element_type=jnp.float32)


# ---------------------------------------------------------------------------
# Wrapper reproducing OutputLayer.forwardTensor(x, model)
# ---------------------------------------------------------------------------
def output_layer_forward(x, embedding, final_norm_w, embed_norm_w,
                         *, model=0, eps=1e-6, tm=512, tv=1024, te=256):
    """x: (B, S, d), embedding: (V, H), norm weights: (H,). Returns (B, S, V) f32."""
    B, S, d = x.shape
    V, H = embedding.shape
    skip = model * d
    assert skip + d <= H

    # Tiny XLA glue: fold (1 + w) scale vectors, flatten (B, S) -> M.
    final_scale = (1.0 + final_norm_w[skip:skip + d].astype(jnp.float32)).reshape(1, d)
    embed_scale = (1.0 + embed_norm_w[0:d].astype(jnp.float32)).reshape(1, d)
    x2d = x.reshape(B * S, d)          # original dtype; kernel upcasts to f32
    M = B * S

    # Bounded, sublane/lane-aligned tiles. No input padding: cdiv grids let
    # Pallas handle edge blocks (their garbage only reaches unstored rows/cols).
    tm = min(tm, _round_up(M, 8))
    tv = min(tv, _round_up(V, 128))
    te = min(te, _round_up(V, 8))

    # Embedding RMSNorm, hoisted out of the logits grid (reused by every row block).
    if d == H or d % 128 == 0:
        en = _embed_rmsnorm(embedding, embed_scale, d=d, col_block=model,
                            eps=eps, tile=te)
    else:
        # TODO(synk): d not lane-aligned and != H; fall back to an XLA column slice.
        en = _embed_rmsnorm(embedding[:, skip:skip + d], embed_scale, d=d,
                            col_block=0, eps=eps, tile=te)

    grid = (pl.cdiv(M, tm), pl.cdiv(V, tv))
    cost = pl.CostEstimate(
        flops=2 * M * V * d,
        transcendentals=M,
        bytes_accessed=(M * V * 4                      # logits write
                        + M * d * x2d.dtype.itemsize   # x read (once per row block)
                        + grid[0] * V * d * 2          # en re-reads across i
                        + 4 * d))

    logits = pl.pallas_call(
        functools.partial(_logits_kernel, eps=eps),
        out_shape=jax.ShapeDtypeStruct((M, V), jnp.float32),
        grid_spec=pltpu.PrefetchScalarGridSpec(
            num_scalar_prefetch=0,
            grid=grid,
            in_specs=[
                pl.BlockSpec((tm, d), lambda i, j: (i, 0)),   # raw x rows
                pl.BlockSpec((1, d), lambda i, j: (0, 0)),    # (1 + final_norm_w slice)
                pl.BlockSpec((tv, d), lambda i, j: (j, 0)),   # normed embedding rows
            ],
            out_specs=pl.BlockSpec((tm, tv), lambda i, j: (i, j)),
            scratch_shapes=[pltpu.VMEM((tm, d), jnp.bfloat16)],
        ),
        compiler_params=pltpu.CompilerParams(
            dimension_semantics=("parallel", "arbitrary"),
            vmem_limit_bytes=_vmem_limit_bytes()),
        cost_estimate=cost,
    )(x2d, final_scale, en)

    return logits.reshape(B, S, V)


# ---------------------------------------------------------------------------
# References for validation
# ---------------------------------------------------------------------------
def _reference_f32(x, embedding, final_norm_w, embed_norm_w, model=0, eps=1e-6):
    B, S, d = x.shape
    skip = model * d

    def rms(v):
        return v * jax.lax.rsqrt(jnp.mean(v * v, axis=-1, keepdims=True) + eps)

    se = embedding[:, skip:skip + d]
    ne = rms(se) * (1.0 + embed_norm_w[0:d])
    xn = rms(x) * (1.0 + final_norm_w[skip:skip + d])
    return jnp.einsum("bsd,vd->bsv", xn, ne)


def _reference_bf16_operands(x, embedding, final_norm_w, embed_norm_w, model=0, eps=1e-6):
    # Same math but with normalized operands rounded to bf16 (matches the
    # kernel's MXU-operand precision; f32 accumulation).
    B, S, d = x.shape
    skip = model * d

    def rms(v):
        return v * jax.lax.rsqrt(jnp.mean(v * v, axis=-1, keepdims=True) + eps)

    se = embedding[:, skip:skip + d]
    ne = (rms(se) * (1.0 + embed_norm_w[0:d])).astype(jnp.bfloat16).astype(jnp.float32)
    xn = (rms(x) * (1.0 + final_norm_w[skip:skip + d])).astype(jnp.bfloat16).astype(jnp.float32)
    return jnp.einsum("bsd,vd->bsv", xn, ne)


if __name__ == "__main__":
    # Small config: batch=2, seq=8, hidden=32, vocab=256, model_count=1 (model=0)
    B, S, H, V = 2, 8, 32, 256
    key = jax.random.PRNGKey(0)
    kx, ke = jax.random.split(key)

    x = jax.random.normal(kx, (B, S, H), dtype=jnp.float32)
    embedding = jax.random.normal(ke, (V, H), dtype=jnp.float32) * 0.02

    # RMSNorm.__init__ initializes weight = zeros(hidden_size) for both norms.
    final_norm_w = jnp.zeros((H,), dtype=jnp.float32)
    embed_norm_w = jnp.zeros((H,), dtype=jnp.float32)

    out = output_layer_forward(x, embedding, final_norm_w, embed_norm_w, model=0)
    out = jax.block_until_ready(out)
    assert out.shape == (B, S, V)

    # Tight check against a reference with matching bf16-operand precision.
    ref_bf16 = _reference_bf16_operands(x, embedding, final_norm_w, embed_norm_w, model=0)
    assert jnp.allclose(out, ref_bf16, atol=2e-3, rtol=2e-3)

    # Loose check against the pure-f32 PyTorch-equivalent reference
    # (tolerance relaxed because matmul operands are bf16 on the MXU).
    ref_f32 = _reference_f32(x, embedding, final_norm_w, embed_norm_w, model=0)
    assert jnp.allclose(out, ref_f32, atol=1e-1, rtol=1e-1)

    # TODO(synk): forwardTuple (training, tuple-of-tuples) is a plain Python loop
    # over forwardTensor per (level, model); it reuses the same kernels and is
    # intentionally left at the wrapper level.
    print("KERNEL_OK")
</pallas_src>

<mosaic_0001>
module attributes {stable_mosaic.version = 11 : i64} {
  func.func @_rmsnorm_scale_kernel(%arg0: i32, %arg1: memref<256x32xf32, #tpu.memory_space<vmem>>, %arg2: memref<1x32xf32, #tpu.memory_space<vmem>>, %arg3: memref<256x32xbf16, #tpu.memory_space<vmem>>) attributes {dimension_semantics = [#tpu.dimension_semantics<parallel>], iteration_bounds = array<i64: 1>, scalar_prefetch = 0 : i64, scratch_operands = 0 : i64, tpu.core_type = #tpu.core_type<tc>, window_params = [{transform_indices = @transform_0, window_bounds = array<i64: 256, 32>}, {pipeline_mode = #tpu.pipeline_mode<synchronous>, transform_indices = @transform_1, window_bounds = array<i64: 1, 32>}, {transform_indices = @transform_2, window_bounds = array<i64: 256, 32>}]} {
    %c0 = arith.constant 0 : index
    %c0_0 = arith.constant 0 : index
    %0 = vector.load %arg1[%c0, %c0_0] : memref<256x32xf32, #tpu.memory_space<vmem>>, vector<256x32xf32>
    %1 = arith.mulf %0, %0 : vector<256x32xf32>
    %cst = arith.constant dense<0.000000e+00> : vector<256xf32>
    %2 = vector.multi_reduction <add>, %1, %cst [1] : vector<256x32xf32> to vector<256xf32>
    %3 = vector.shape_cast %2 : vector<256xf32> to vector<256x1xf32>
    %cst_1 = arith.constant 3.200000e+01 : f32
    %4 = vector.broadcast %cst_1 : f32 to vector<256x1xf32>
    %5 = arith.divf %3, %4 : vector<256x1xf32>
    %cst_2 = arith.constant 9.99999997E-7 : f32
    %6 = vector.broadcast %cst_2 : f32 to vector<256x1xf32>
    %7 = arith.addf %5, %6 : vector<256x1xf32>
    %8 = math.rsqrt %7 : vector<256x1xf32>
    %9 = vector.broadcast %8 : vector<256x1xf32> to vector<256x32xf32>
    %10 = arith.mulf %0, %9 : vector<256x32xf32>
    %c0_3 = arith.constant 0 : index
    %c0_4 = arith.constant 0 : index
    %11 = vector.load %arg2[%c0_3, %c0_4] : memref<1x32xf32, #tpu.memory_space<vmem>>, vector<1x32xf32>
    %12 = vector.broadcast %11 : vector<1x32xf32> to vector<256x32xf32>
    %13 = arith.mulf %10, %12 : vector<256x32xf32>
    %14 = arith.truncf %13 : vector<256x32xf32> to vector<256x32xbf16>
    %c0_5 = arith.constant 0 : index
    %c0_6 = arith.constant 0 : index
    %15 = vector.load %arg3[%c0_5, %c0_6] : memref<256x32xbf16, #tpu.memory_space<vmem>>, vector<256x32xbf16>
    tpu.vector_store %arg3[%c0_5, %c0_6], %14 {strides = array<i32>} : memref<256x32xbf16, #tpu.memory_space<vmem>>, vector<256x32xbf16>,
    return
  }
  func.func @transform_0(%arg0: i32) -> (i32, i32) {
    %c0_i32 = arith.constant 0 : i32
    %c0_i32_0 = arith.constant 0 : i32
    return %arg0, %c0_i32 : i32, i32
  }
  func.func @transform_1(%arg0: i32) -> (i32, i32) {
    %c0_i32 = arith.constant 0 : i32
    %c0_i32_0 = arith.constant 0 : i32
    %c0_i32_1 = arith.constant 0 : i32
    return %c0_i32, %c0_i32_0 : i32, i32
  }
  func.func @transform_2(%arg0: i32) -> (i32, i32) {
    %c0_i32 = arith.constant 0 : i32
    %c0_i32_0 = arith.constant 0 : i32
    return %arg0, %c0_i32 : i32, i32
  }
}

</mosaic_0001>

<llo_original>
// kernel: tpu_custom_call.1
$region0: #{tpu_custom_call.1}
  #allocation0 [shape = 'u32[]', space=smem, size = 0x4, offset = 0x4, fixed_abs, tag = 'smem constant byte address 0x4 - core index']
  #allocation1 [shape = 'u32[144,128]{1,0:T(1,128)}', space=vmem, size = 0x12000, scoped, tag = 'internal scratch']
  %s0 = inlined_call_operand.vmem [shape: f32[256,32], index: 0, kind: input, shape index: {}]
  %s1 = inlined_call_operand.vmem [shape: f32[1,32], index: 1, kind: input, shape index: {}]
  %s2 = inlined_call_operand.vmem [shape: bf16[256,32], index: 2, kind: output, shape index: {}]
  %s3 = sld [smem:[#allocation0]]
  $region18: #{tpu_custom_call.1} parent=0
    _
  %s5 = ssub.s32 1, %s3
  %s6 = scalar_select 0, %s5, %s3
  // Predicated region
  $region2: #{tpu_custom_call.1} parent=0 // pred_check
    _
  $region3: #{tpu_custom_call.1} parent=0 // pred_check_branch
    %8 = sbr.rel (0) target = $region5
  $region4: #{tpu_custom_call.1} parent=0 // pred_region
    _
  $region5: #{tpu_custom_call.1} parent=0 // pred_fallthru
    _
  // Predicated region
  $region6: #{tpu_custom_call.1} parent=0 // pred_check
    _
  $region7: #{tpu_custom_call.1} parent=0 // pred_check_branch
    %10 = sbr.rel (0) target = $region9
  $region8: #{tpu_custom_call.1} parent=0 // pred_region
    _
  $region9: #{tpu_custom_call.1} parent=0 // pred_fallthru
    _
  %v11 = vld [vmem:[%s0] sm:$0xff]
  %v12 = vld [vmem:[%s0 + $0x8] sm:$0xff]
  %v13 = vld [vmem:[%s0 + $0x10] sm:$0xff]
  %v14 = vld [vmem:[%s0 + $0x18] sm:$0xff]
  %v15 = vld [vmem:[%s0 + $0x20] sm:$0xff]
  %v16 = vld [vmem:[%s0 + $0x28] sm:$0xff]
  %v17 = vld [vmem:[%s0 + $0x30] sm:$0xff]
  %v18 = vld [vmem:[%s0 + $0x38] sm:$0xff]
  %v19 = vld [vmem:[%s0 + $0x40] sm:$0xff]
  %v20 = vld [vmem:[%s0 + $0x48] sm:$0xff]
  %v21 = vld [vmem:[%s0 + $0x50] sm:$0xff]
  %v22 = vld [vmem:[%s0 + $0x58] sm:$0xff]
  %v23 = vld [vmem:[%s0 + $0x60] sm:$0xff]
  %v24 = vld [vmem:[%s0 + $0x68] sm:$0xff]
  %v25 = vld [vmem:[%s0 + $0x70] sm:$0xff]
  %v26 = vld [vmem:[%s0 + $0x78] sm:$0xff]
  %v27 = vld [vmem:[%s0 + $0x80] sm:$0xff]
  %v28 = vld [vmem:[%s0 + $0x88] sm:$0xff]
  %v29 = vld [vmem:[%s0 + $0x90] sm:$0xff]
  %v30 = vld [vmem:[%s0 + $0x98] sm:$0xff]
  %v31 = vld [vmem:[%s0 + $0xa0] sm:$0xff]
  %v32 = vld [vmem:[%s0 + $0xa8] sm:$0xff]
  %v33 = vld [vmem:[%s0 + $0xb0] sm:$0xff]
  %v34 = vld [vmem:[%s0 + $0xb8] sm:$0xff]
  %v35 = vld [vmem:[%s0 + $0xc0] sm:$0xff]
  %v36 = vld [vmem:[%s0 + $0xc8] sm:$0xff]
  %v37 = vld [vmem:[%s0 + $0xd0] sm:$0xff]
  %v38 = vld [vmem:[%s0 + $0xd8] sm:$0xff]
  %v39 = vld [vmem:[%s0 + $0xe0] sm:$0xff]
  %v40 = vld [vmem:[%s0 + $0xe8] sm:$0xff]
  %v41 = vld [vmem:[%s0 + $0xf0] sm:$0xff]
  %v42 = vld [vmem:[%s0 + $0xf8] sm:$0xff]
  %v43 = vmul.f32 %v11, %v11
  %v44 = vmul.f32 %v12, %v12
  %v45 = vmul.f32 %v13, %v13
  %v46 = vmul.f32 %v14, %v14
  %v47 = vmul.f32 %v15, %v15
  %v48 = vmul.f32 %v16, %v16
  %v49 = vmul.f32 %v17, %v17
  %v50 = vmul.f32 %v18, %v18
  %v51 = vmul.f32 %v19, %v19
  %v52 = vmul.f32 %v20, %v20
  %v53 = vmul.f32 %v21, %v21
  %v54 = vmul.f32 %v22, %v22
  %v55 = vmul.f32 %v23, %v23
  %v56 = vmul.f32 %v24, %v24
  %v57 = vmul.f32 %v25, %v25
  %v58 = vmul.f32 %v26, %v26
  %v59 = vmul.f32 %v27, %v27
  %v60 = vmul.f32 %v28, %v28
  %v61 = vmul.f32 %v29, %v29
  %v62 = vmul.f32 %v30, %v30
  %v63 = vmul.f32 %v31, %v31
  %v64 = vmul.f32 %v32, %v32
  %v65 = vmul.f32 %v33, %v33
  %v66 = vmul.f32 %v34, %v34
  %v67 = vmul.f32 %v35, %v35
  %v68 = vmul.f32 %v36, %v36
  %v69 = vmul.f32 %v37, %v37
  %v70 = vmul.f32 %v38, %v38
  %v71 = vmul.f32 %v39, %v39
  %v72 = vmul.f32 %v40, %v40
  %v73 = vmul.f32 %v41, %v41
  %v74 = vmul.f32 %v42, %v42
  %vm75 = vcmask 261120
  %v76 = vsel %vm75, %v43, 0.0
  %77 = vadd.xlane.f32.xlu0 %v76
  %v78 = vpop.xlane.xlu0 %77
  %v79 = vsel %vm75, %v44, 0.0
  %80 = vadd.xlane.f32.xlu0 %v79
  %v81 = vpop.xlane.xlu0 %80
  %v82 = vsel %vm75, %v45, 0.0
  %83 = vadd.xlane.f32.xlu0 %v82
  %v84 = vpop.xlane.xlu0 %83
  %v85 = vsel %vm75, %v46, 0.0
  %86 = vadd.xlane.f32.xlu0 %v85
  %v87 = vpop.xlane.xlu0 %86
  %v88 = vsel %vm75, %v47, 0.0
  %89 = vadd.xlane.f32.xlu0 %v88
  %v90 = vpop.xlane.xlu0 %89
  %v91 = vsel %vm75, %v48, 0.0
  %92 = vadd.xlane.f32.xlu0 %v91
  %v93 = vpop.xlane.xlu0 %92
  %v94 = vsel %vm75, %v49, 0.0
  %95 = vadd.xlane.f32.xlu0 %v94
  %v96 = vpop.xlane.xlu0 %95
  %v97 = vsel %vm75, %v50, 0.0
  %98 = vadd.xlane.f32.xlu0 %v97
  %v99 = vpop.xlane.xlu0 %98
  %v100 = vsel %vm75, %v51, 0.0
  %101 = vadd.xlane.f32.xlu0 %v100
  %v102 = vpop.xlane.xlu0 %101
  %v103 = vsel %vm75, %v52, 0.0
  %104 = vadd.xlane.f32.xlu0 %v103
  %v105 = vpop.xlane.xlu0 %104
  %v106 = vsel %vm75, %v53, 0.0
  %107 = vadd.xlane.f32.xlu0 %v106
  %v108 = vpop.xlane.xlu0 %107
  %v109 = vsel %vm75, %v54, 0.0
  %110 = vadd.xlane.f32.xlu0 %v109
  %v111 = vpop.xlane.xlu0 %110
  %v112 = vsel %vm75, %v55, 0.0
  %113 = vadd.xlane.f32.xlu0 %v112
  %v114 = vpop.xlane.xlu0 %113
  %v115 = vsel %vm75, %v56, 0.0
  %116 = vadd.xlane.f32.xlu0 %v115
  %v117 = vpop.xlane.xlu0 %116
  %v118 = vsel %vm75, %v57, 0.0
  %119 = vadd.xlane.f32.xlu0 %v118
  %v120 = vpop.xlane.xlu0 %119
  %v121 = vsel %vm75, %v58, 0.0
  %122 = vadd.xlane.f32.xlu0 %v121
  %v123 = vpop.xlane.xlu0 %122
  %v124 = vsel %vm75, %v59, 0.0
  %125 = vadd.xlane.f32.xlu0 %v124
  %v126 = vpop.xlane.xlu0 %125
  %v127 = vsel %vm75, %v60, 0.0
  %128 = vadd.xlane.f32.xlu0 %v127
  %v129 = vpop.xlane.xlu0 %128
  %v130 = vsel %vm75, %v61, 0.0
  %131 = vadd.xlane.f32.xlu0 %v130
  %v132 = vpop.xlane.xlu0 %131
  %v133 = vsel %vm75, %v62, 0.0
  %134 = vadd.xlane.f32.xlu0 %v133
  %v135 = vpop.xlane.xlu0 %134
  %v136 = vsel %vm75, %v63, 0.0
  %137 = vadd.xlane.f32.xlu0 %v136
  %v138 = vpop.xlane.xlu0 %137
  %v139 = vsel %vm75, %v64, 0.0
  %140 = vadd.xlane.f32.xlu0 %v139
  %v141 = vpop.xlane.xlu0 %140
  %v142 = vsel %vm75, %v65, 0.0
  %143 = vadd.xlane.f32.xlu0 %v142
  %v144 = vpop.xlane.xlu0 %143
  %v145 = vsel %vm75, %v66, 0.0
  %146 = vadd.xlane.f32.xlu0 %v145
  %v147 = vpop.xlane.xlu0 %146
  %v148 = vsel %vm75, %v67, 0.0
  %149 = vadd.xlane.f32.xlu0 %v148
  %v150 = vpop.xlane.xlu0 %149
  %v151 = vsel %vm75, %v68, 0.0
  %152 = vadd.xlane.f32.xlu0 %v151
  %v153 = vpop.xlane.xlu0 %152
  %v154 = vsel %vm75, %v69, 0.0
  %155 = vadd.xlane.f32.xlu0 %v154
  %v156 = vpop.xlane.xlu0 %155
  %v157 = vsel %vm75, %v70, 0.0
  %158 = vadd.xlane.f32.xlu0 %v157
  %v159 = vpop.xlane.xlu0 %158
  %v160 = vsel %vm75, %v71, 0.0
  %161 = vadd.xlane.f32.xlu0 %v160
  %v162 = vpop.xlane.xlu0 %161
  %v163 = vsel %vm75, %v72, 0.0
  %164 = vadd.xlane.f32.xlu0 %v163
  %v165 = vpop.xlane.xlu0 %164
  %v166 = vsel %vm75, %v73, 0.0
  %167 = vadd.xlane.f32.xlu0 %v166
  %v168 = vpop.xlane.xlu0 %167
  %v169 = vsel %vm75, %v74, 0.0
  %170 = vadd.xlane.f32.xlu0 %v169
  %v171 = vpop.xlane.xlu0 %170
  %v172 = vrcp.pop 32.0
  %v173 = vmul.f32 %v78, %v172
  %v174 = vmul.f32 %v81, %v172
  %v175 = vmul.f32 %v84, %v172
  %v176 = vmul.f32 %v87, %v172
  %v177 = vmul.f32 %v90, %v172
  %v178 = vmul.f32 %v93, %v172
  %v179 = vmul.f32 %v96, %v172
  %v180 = vmul.f32 %v99, %v172
  %v181 = vmul.f32 %v102, %v172
  %v182 = vmul.f32 %v105, %v172
  %v183 = vmul.f32 %v108, %v172
  %v184 = vmul.f32 %v111, %v172
  %v185 = vmul.f32 %v114, %v172
  %v186 = vmul.f32 %v117, %v172
  %v187 = vmul.f32 %v120, %v172
  %v188 = vmul.f32 %v123, %v172
  %v189 = vmul.f32 %v126, %v172
  %v190 = vmul.f32 %v129, %v172
  %v191 = vmul.f32 %v132, %v172
  %v192 = vmul.f32 %v135, %v172
  %v193 = vmul.f32 %v138, %v172
  %v194 = vmul.f32 %v141, %v172
  %v195 = vmul.f32 %v144, %v172
  %v196 = vmul.f32 %v147, %v172
  %v197 = vmul.f32 %v150, %v172
  %v198 = vmul.f32 %v153, %v172
  %v199 = vmul.f32 %v156, %v172
  %v200 = vmul.f32 %v159, %v172
  %v201 = vmul.f32 %v162, %v172
  %v202 = vmul.f32 %v165, %v172
  %v203 = vmul.f32 %v168, %v172
  %v204 = vmul.f32 %v171, %v172
  %v205 = vadd.f32 %v173, 1e-06
  %v206 = vadd.f32 %v174, 1e-06
  %v207 = vadd.f32 %v175, 1e-06
  %v208 = vadd.f32 %v176, 1e-06
  %v209 = vadd.f32 %v177, 1e-06
  %v210 = vadd.f32 %v178, 1e-06
  %v211 = vadd.f32 %v179, 1e-06
  %v212 = vadd.f32 %v180, 1e-06
  %v213 = vadd.f32 %v181, 1e-06
  %v214 = vadd.f32 %v182, 1e-06
  %v215 = vadd.f32 %v183, 1e-06
  %v216 = vadd.f32 %v184, 1e-06
  %v217 = vadd.f32 %v185, 1e-06
  %v218 = vadd.f32 %v186, 1e-06
  %v219 = vadd.f32 %v187, 1e-06
  %v220 = vadd.f32 %v188, 1e-06
  %v221 = vadd.f32 %v189, 1e-06
  %v222 = vadd.f32 %v190, 1e-06
  %v223 = vadd.f32 %v191, 1e-06
  %v224 = vadd.f32 %v192, 1e-06
  %v225 = vadd.f32 %v193, 1e-06
  %v226 = vadd.f32 %v194, 1e-06
  %v227 = vadd.f32 %v195, 1e-06
  %v228 = vadd.f32 %v196, 1e-06
  %v229 = vadd.f32 %v197, 1e-06
  %v230 = vadd.f32 %v198, 1e-06
  %v231 = vadd.f32 %v199, 1e-06
  %v232 = vadd.f32 %v200, 1e-06
  %v233 = vadd.f32 %v201, 1e-06
  %v234 = vadd.f32 %v202, 1e-06
  %v235 = vadd.f32 %v203, 1e-06
  %v236 = vadd.f32 %v204, 1e-06
  %v237 = vrsqrt.pop %v205
  %v238 = vrsqrt.pop %v206
  %v239 = vrsqrt.pop %v207
  %v240 = vrsqrt.pop %v208
  %v241 = vrsqrt.pop %v209
  %v242 = vrsqrt.pop %v210
  %v243 = vrsqrt.pop %v211
  %v244 = vrsqrt.pop %v212
  %v245 = vrsqrt.pop %v213
  %v246 = vrsqrt.pop %v214
  %v247 = vrsqrt.pop %v215
  %v248 = vrsqrt.pop %v216
  %v249 = vrsqrt.pop %v217
  %v250 = vrsqrt.pop %v218
  %v251 = vrsqrt.pop %v219
  %v252 = vrsqrt.pop %v220
  %v253 = vrsqrt.pop %v221
  %v254 = vrsqrt.pop %v222
  %v255 = vrsqrt.pop %v223
  %v256 = vrsqrt.pop %v224
  %v257 = vrsqrt.pop %v225
  %v258 = vrsqrt.pop %v226
  %v259 = vrsqrt.pop %v227
  %v260 = vrsqrt.pop %v228
  %v261 = vrsqrt.pop %v229
  %v262 = vrsqrt.pop %v230
  %v263 = vrsqrt.pop %v231
  %v264 = vrsqrt.pop %v232
  %v265 = vrsqrt.pop %v233
  %v266 = vrsqrt.pop %v234
  %v267 = vrsqrt.pop %v235
  %v268 = vrsqrt.pop %v236
  %v269 = vmul.f32 %v11, %v237
  %v270 = vmul.f32 %v12, %v238
  %v271 = vmul.f32 %v13, %v239
  %v272 = vmul.f32 %v14, %v240
  %v273 = vmul.f32 %v15, %v241
  %v274 = vmul.f32 %v16, %v242
  %v275 = vmul.f32 %v17, %v243
  %v276 = vmul.f32 %v18, %v244
  %v277 = vmul.f32 %v19, %v245
  %v278 = vmul.f32 %v20, %v246
  %v279 = vmul.f32 %v21, %v247
  %v280 = vmul.f32 %v22, %v248
  %v281 = vmul.f32 %v23, %v249
  %v282 = vmul.f32 %v24, %v250
  %v283 = vmul.f32 %v25, %v251
  %v284 = vmul.f32 %v26, %v252
  %v285 = vmul.f32 %v27, %v253
  %v286 = vmul.f32 %v28, %v254
  %v287 = vmul.f32 %v29, %v255
  %v288 = vmul.f32 %v30, %v256
  %v289 = vmul.f32 %v31, %v257
  %v290 = vmul.f32 %v32, %v258
  %v291 = vmul.f32 %v33, %v259
  %v292 = vmul.f32 %v34, %v260
  %v293 = vmul.f32 %v35, %v261
  %v294 = vmul.f32 %v36, %v262
  %v295 = vmul.f32 %v37, %v263
  %v296 = vmul.f32 %v38, %v264
  %v297 = vmul.f32 %v39, %v265
  %v298 = vmul.f32 %v40, %v266
  %v299 = vmul.f32 %v41, %v267
  %v300 = vmul.f32 %v42, %v268
  %v301 = vld [vmem:[%s1] sm:$0x1]
  %v303 = vlaneseq
  %v304 = vshrl.u32 %v303, 7
  %v305 = vsub.s32 0, %v304
  %v306 = vrot.slane %v301, %v305
  %v308 = vmul.f32 %v269, %v306
  %v309 = vmul.f32 %v270, %v306
  %v310 = vmul.f32 %v271, %v306
  %v311 = vmul.f32 %v272, %v306
  %v312 = vmul.f32 %v273, %v306
  %v313 = vmul.f32 %v274, %v306
  %v314 = vmul.f32 %v275, %v306
  %v315 = vmul.f32 %v276, %v306
  %v316 = vmul.f32 %v277, %v306
  %v317 = vmul.f32 %v278, %v306
  %v318 = vmul.f32 %v279, %v306
  %v319 = vmul.f32 %v280, %v306
  %v320 = vmul.f32 %v281, %v306
  %v321 = vmul.f32 %v282, %v306
  %v322 = vmul.f32 %v283, %v306
  %v323 = vmul.f32 %v284, %v306
  %v324 = vmul.f32 %v285, %v306
  %v325 = vmul.f32 %v286, %v306
  %v326 = vmul.f32 %v287, %v306
  %v327 = vmul.f32 %v288, %v306
  %v328 = vmul.f32 %v289, %v306
  %v329 = vmul.f32 %v290, %v306
  %v330 = vmul.f32 %v291, %v306
  %v331 = vmul.f32 %v292, %v306
  %v332 = vmul.f32 %v293, %v306
  %v333 = vmul.f32 %v294, %v306
  %v334 = vmul.f32 %v295, %v306
  %v335 = vmul.f32 %v296, %v306
  %v336 = vmul.f32 %v297, %v306
  %v337 = vmul.f32 %v298, %v306
  %v338 = vmul.f32 %v299, %v306
  %v339 = vmul.f32 %v300, %v306
  %v340 = vpack.c.bf16 %v309, %v308
  %v341 = vpack.c.bf16 %v311, %v310
  %v342 = vpack.c.bf16 %v313, %v312
  %v343 = vpack.c.bf16 %v315, %v314
  %v344 = vpack.c.bf16 %v317, %v316
  %v345 = vpack.c.bf16 %v319, %v318
  %v346 = vpack.c.bf16 %v321, %v320
  %v347 = vpack.c.bf16 %v323, %v322
  %v348 = vpack.c.bf16 %v325, %v324
  %v349 = vpack.c.bf16 %v327, %v326
  %v350 = vpack.c.bf16 %v329, %v328
  %v351 = vpack.c.bf16 %v331, %v330
  %v352 = vpack.c.bf16 %v333, %v332
  %v353 = vpack.c.bf16 %v335, %v334
  %v354 = vpack.c.bf16 %v337, %v336
  %v355 = vpack.c.bf16 %v339, %v338
  %v372 = vunpack.c.l.b16 %v340
  %v373 = vunpack.c.h.b16 %v340
  %v374 = vunpack.c.l.b16 %v341
  %v375 = vunpack.c.h.b16 %v341
  %v376 = vunpack.c.l.b16 %v342
  %v377 = vunpack.c.h.b16 %v342
  %v378 = vunpack.c.l.b16 %v343
  %v379 = vunpack.c.h.b16 %v343
  %v380 = vunpack.c.l.b16 %v344
  %v381 = vunpack.c.h.b16 %v344
  %v382 = vunpack.c.l.b16 %v345
  %v383 = vunpack.c.h.b16 %v345
  %v384 = vunpack.c.l.b16 %v346
  %v385 = vunpack.c.h.b16 %v346
  %v386 = vunpack.c.l.b16 %v347
  %v387 = vunpack.c.h.b16 %v347
  %v388 = vunpack.c.l.b16 %v348
  %v389 = vunpack.c.h.b16 %v348
  %v390 = vunpack.c.l.b16 %v349
  %v391 = vunpack.c.h.b16 %v349
  %v392 = vunpack.c.l.b16 %v350
  %v393 = vunpack.c.h.b16 %v350
  %v394 = vunpack.c.l.b16 %v351
  %v395 = vunpack.c.h.b16 %v351
  %v396 = vunpack.c.l.b16 %v352
  %v397 = vunpack.c.h.b16 %v352
  %v398 = vunpack.c.l.b16 %v353
  %v399 = vunpack.c.h.b16 %v353
  %v400 = vunpack.c.l.b16 %v354
  %v401 = vunpack.c.h.b16 %v354
  %v402 = vunpack.c.l.b16 %v355
  %v403 = vunpack.c.h.b16 %v355
  %v404 = vpack.c.b16 %v372, %v372
  %v405 = vpack.c.b16 %v373, %v373
  %v406 = vpack.c.b16 %v374, %v374
  %v407 = vpack.c.b16 %v375, %v375
  %v408 = vpack.c.b16 %v376, %v376
  %v409 = vpack.c.b16 %v377, %v377
  %v410 = vpack.c.b16 %v378, %v378
  %v411 = vpack.c.b16 %v379, %v379
  %v412 = vpack.c.b16 %v380, %v380
  %v413 = vpack.c.b16 %v381, %v381
  %v414 = vpack.c.b16 %v382, %v382
  %v415 = vpack.c.b16 %v383, %v383
  %v416 = vpack.c.b16 %v384, %v384
  %v417 = vpack.c.b16 %v385, %v385
  %v418 = vpack.c.b16 %v386, %v386
  %v419 = vpack.c.b16 %v387, %v387
  %v420 = vpack.c.b16 %v388, %v388
  %v421 = vpack.c.b16 %v389, %v389
  %v422 = vpack.c.b16 %v390, %v390
  %v423 = vpack.c.b16 %v391, %v391
  %v424 = vpack.c.b16 %v392, %v392
  %v425 = vpack.c.b16 %v393, %v393
  %v426 = vpack.c.b16 %v394, %v394
  %v427 = vpack.c.b16 %v395, %v395
  %v428 = vpack.c.b16 %v396, %v396
  %v429 = vpack.c.b16 %v397, %v397
  %v430 = vpack.c.b16 %v398, %v398
  %v431 = vpack.c.b16 %v399, %v399
  %v432 = vpack.c.b16 %v400, %v400
  %v433 = vpack.c.b16 %v401, %v401
  %v434 = vpack.c.b16 %v402, %v402
  %v435 = vpack.c.b16 %v403, %v403
  %vm468 = vcmask 257024
  %469 = vst.msk [vmem:[%s2] sm:$0xf] %vm468, %v404
  %470 = vst.msk [vmem:[%s2 + $0x4] sm:$0xf] %vm468, %v405
  %471 = vst.msk [vmem:[%s2 + $0x8] sm:$0xf] %vm468, %v406
  %472 = vst.msk [vmem:[%s2 + $0xc] sm:$0xf] %vm468, %v407
  %473 = vst.msk [vmem:[%s2 + $0x10] sm:$0xf] %vm468, %v408
  %474 = vst.msk [vmem:[%s2 + $0x14] sm:$0xf] %vm468, %v409
  %475 = vst.msk [vmem:[%s2 + $0x18] sm:$0xf] %vm468, %v410
  %476 = vst.msk [vmem:[%s2 + $0x1c] sm:$0xf] %vm468, %v411
  %477 = vst.msk [vmem:[%s2 + $0x20] sm:$0xf] %vm468, %v412
  %478 = vst.msk [vmem:[%s2 + $0x24] sm:$0xf] %vm468, %v413
  %479 = vst.msk [vmem:[%s2 + $0x28] sm:$0xf] %vm468, %v414
  %480 = vst.msk [vmem:[%s2 + $0x2c] sm:$0xf] %vm468, %v415
  %481 = vst.msk [vmem:[%s2 + $0x30] sm:$0xf] %vm468, %v416
  %482 = vst.msk [vmem:[%s2 + $0x34] sm:$0xf] %vm468, %v417
  %483 = vst.msk [vmem:[%s2 + $0x38] sm:$0xf] %vm468, %v418
  %484 = vst.msk [vmem:[%s2 + $0x3c] sm:$0xf] %vm468, %v419
  %485 = vst.msk [vmem:[%s2 + $0x40] sm:$0xf] %vm468, %v420
  %486 = vst.msk [vmem:[%s2 + $0x44] sm:$0xf] %vm468, %v421
  %487 = vst.msk [vmem:[%s2 + $0x48] sm:$0xf] %vm468, %v422
  %488 = vst.msk [vmem:[%s2 + $0x4c] sm:$0xf] %vm468, %v423
  %489 = vst.msk [vmem:[%s2 + $0x50] sm:$0xf] %vm468, %v424
  %490 = vst.msk [vmem:[%s2 + $0x54] sm:$0xf] %vm468, %v425
  %491 = vst.msk [vmem:[%s2 + $0x58] sm:$0xf] %vm468, %v426
  %492 = vst.msk [vmem:[%s2 + $0x5c] sm:$0xf] %vm468, %v427
  %493 = vst.msk [vmem:[%s2 + $0x60] sm:$0xf] %vm468, %v428
  %494 = vst.msk [vmem:[%s2 + $0x64] sm:$0xf] %vm468, %v429
  %495 = vst.msk [vmem:[%s2 + $0x68] sm:$0xf] %vm468, %v430
  %496 = vst.msk [vmem:[%s2 + $0x6c] sm:$0xf] %vm468, %v431
  %497 = vst.msk [vmem:[%s2 + $0x70] sm:$0xf] %vm468, %v432
  %498 = vst.msk [vmem:[%s2 + $0x74] sm:$0xf] %vm468, %v433
  %499 = vst.msk [vmem:[%s2 + $0x78] sm:$0xf] %vm468, %v434
  %500 = vst.msk [vmem:[%s2 + $0x7c] sm:$0xf] %vm468, %v435
  // Predicated region
  $region10: #{tpu_custom_call.1} parent=0 // pred_check
    _
  $region11: #{tpu_custom_call.1} parent=0 // pred_check_branch
    %502 = sbr.rel (0) target = $region13
  $region12: #{tpu_custom_call.1} parent=0 // pred_region
    _
  $region13: #{tpu_custom_call.1} parent=0 // pred_fallthru
    _
  // Predicated region
  $region14: #{tpu_custom_call.1} parent=0 // pred_check
    _
  $region15: #{tpu_custom_call.1} parent=0 // pred_check_branch
    %504 = sbr.rel (0) target = $region17
  $region16: #{tpu_custom_call.1} parent=0 // pred_region
    _
  $region17: #{tpu_custom_call.1} parent=0 // pred_fallthru
    _

</llo_original>
